<compile_context>
chip_gen: v7x
topology: tpu7x:2x2x1
jax: 0.10.0
libtpu: 0.0.40
codegen_flags: <defaults>
</compile_context>

<pallas_src>
import functools

import jax
import jax.numpy as jnp
from jax.experimental import pallas as pl
from jax.experimental.pallas import tpu as pltpu


def _round_up(x, m):
    return ((x + m - 1) // m) * m


def _cdiv(a, b):
    return (a + b - 1) // b


def _mlp_kernel(x_ref, *refs, num_layers):
    # x_ref:  (TB, Din0_pad)                 input tile (x dtype, typically f32)
    # refs:   (w0, b0, w1, b1, ..., o_ref)   per-layer padded weights/biases + output
    #   w_l:  (Din_pad_l, Dout_pad_l)        bf16 (or f32), VMEM-resident across grid
    #   b_l:  (1, Dout_pad_l)                f32
    # o_ref:  (TB, Dout_pad_last)            output tile
    o_ref = refs[2 * num_layers]
    # Activation lives in registers / local values; no VMEM scratch round-trip
    # between consecutive MXU ops.
    act = x_ref[...].astype(jnp.float32)
    for l in range(num_layers):  # static unroll over the (small) layer stack
        w_ref = refs[2 * l]
        b_ref = refs[2 * l + 1]
        act = jnp.dot(
            act.astype(w_ref.dtype),          # bf16 operand -> fast MXU path
            w_ref[...],
            preferred_element_type=jnp.float32,  # f32 accumulation
        )
        act = act + b_ref[...]                # f32 bias, broadcast over rows
    o_ref[...] = act.astype(o_ref.dtype)


def _resident_spec(shape, pipeline_mode):
    """BlockSpec for an array that is fully resident (constant index map)."""
    index_map = lambda i: (0,) * len(shape)
    if pipeline_mode is None:
        return pl.BlockSpec(shape, index_map)
    return pl.BlockSpec(shape, index_map, pipeline_mode=pipeline_mode)


def pack_linear_mlp_params(params, compute_dtype=jnp.bfloat16):
    """One-time packing of (W:(in,out), b:(out,)) params.

    Pads each layer to its own (round_up(in,128), round_up(out,128)) lane-dense
    shape and casts weights to `compute_dtype` (biases stay f32).  Zero padding
    keeps padded feature columns exactly zero through every layer, so the math
    is unchanged.  Call this ONCE outside the jitted forward.
    """
    packed = []
    for w, b in params:
        idim, odim = w.shape
        dip, dop = _round_up(idim, 128), _round_up(odim, 128)
        w_p = jnp.zeros((dip, dop), compute_dtype).at[:idim, :odim].set(
            w.astype(compute_dtype)
        )
        b_p = jnp.zeros((1, dop), jnp.float32).at[0, :odim].set(b.astype(jnp.float32))
        packed.append((w_p, b_p))
    return tuple(packed)


def linear_mlp_pallas(x, packed_params, *, out_dim, block_b=256):
    """Fused MLP forward: x:(B, in_dim), packed_params from pack_linear_mlp_params."""
    B, in_dim = x.shape
    num_layers = len(packed_params)
    din_pads = [w.shape[0] for w, _ in packed_params]
    dout_pads = [w.shape[1] for w, _ in packed_params]
    assert in_dim <= din_pads[0]
    assert out_dim <= dout_pads[-1]

    dtype = x.dtype

    # Batch tiling: sublane-align to 16 (covers f32's 8 and bf16's 16), cap at
    # block_b rows, and make sure the "parallel" batch axis has >=2 grid steps
    # when there is enough work so v7x's second TensorCore is used (on 1-TC
    # chips the extra grid step costs ~0.35us, negligible).
    PB = _round_up(B, 16)
    TB = min(_round_up(block_b, 16), PB)
    while _cdiv(PB, TB) < 2 and TB >= 32:
        TB //= 2
    n_blocks = _cdiv(PB, TB)  # cdiv grid: ragged last tile instead of 2x over-pad

    # Pad the input only when needed (x-dependent, so it stays in the forward).
    if PB == B and in_dim == din_pads[0]:
        x_pad = x
    else:
        x_pad = jnp.zeros((PB, din_pads[0]), dtype).at[:B, :in_dim].set(x)

    # --- VMEM budgeting ----------------------------------------------------
    # Resident weight/bias bytes (one copy).
    wb_bytes = sum(
        w.size * w.dtype.itemsize + b.size * b.dtype.itemsize
        for w, b in packed_params
    )
    # The weight/bias index maps are constant across the grid, so double
    # buffering buys nothing.  Single-buffer them once they are big enough to
    # matter (this is what keeps large stacks inside v7x's 64 MiB/TC VMEM).
    single_buffer = wb_bytes > (4 << 20)
    n_buf = 1 if single_buffer else 2
    resident_mode = pl.Buffered(1) if single_buffer else None

    act_bytes = 2 * TB * din_pads[0] * dtype.itemsize  # double-buffered in tile
    act_bytes += 2 * TB * dout_pads[-1] * dtype.itemsize  # double-buffered out tile
    vmem_limit = int(
        min(max(n_buf * wb_bytes + act_bytes + (8 << 20), 32 << 20), 100 << 20)
    )
    # ------------------------------------------------------------------------

    in_specs = [pl.BlockSpec((TB, din_pads[0]), lambda i: (i, 0))]
    for w, b in packed_params:
        in_specs.append(_resident_spec(w.shape, resident_mode))
        in_specs.append(_resident_spec(b.shape, resident_mode))

    flat_wb = [a for pair in packed_params for a in pair]

    out_pad = pl.pallas_call(
        functools.partial(_mlp_kernel, num_layers=num_layers),
        out_shape=jax.ShapeDtypeStruct((PB, dout_pads[-1]), dtype),
        grid=(n_blocks,),
        in_specs=in_specs,
        out_specs=pl.BlockSpec((TB, dout_pads[-1]), lambda i: (i, 0)),
        compiler_params=pltpu.CompilerParams(
            # Batch tiles are independent -> shard across TensorCores on v7x.
            dimension_semantics=("parallel",),
            vmem_limit_bytes=vmem_limit,
        ),
    )(x_pad, *flat_wb)

    # Slice back to the true (unpadded) output.
    return out_pad[:B, :out_dim]


def init_linear_mlp_params(key, layer_dim, dtype=jnp.float32):
    """Deterministic init matching nn.Linear shapes (weight stored as (in, out))."""
    params = []
    for idim, odim in zip(layer_dim[:-1], layer_dim[1:]):
        key, kw, kb = jax.random.split(key, 3)
        bound = 1.0 / jnp.sqrt(idim)
        w = jax.random.uniform(kw, (idim, odim), dtype, -bound, bound)
        b = jax.random.uniform(kb, (odim,), dtype, -bound, bound)
        params.append((w, b))
    return params


@functools.partial(jax.jit, static_argnames=("out_dim", "block_b"))
def linear_mlp_forward(x, packed_params, out_dim, block_b=256):
    return linear_mlp_pallas(x, packed_params, out_dim=out_dim, block_b=block_b)


if __name__ == "__main__":
    layer_dim = [32, 64, 16]  # LinearMLP(layer_dim)
    batch = 8

    key = jax.random.PRNGKey(0)
    key, kx = jax.random.split(key)
    x = jax.random.normal(kx, (batch, layer_dim[0]), jnp.float32)

    params = init_linear_mlp_params(key, layer_dim)

    # One-time packing (padding + bf16 cast) OUTSIDE the jitted forward path.
    packed = pack_linear_mlp_params(params, compute_dtype=jnp.bfloat16)

    out = linear_mlp_forward(x, packed, out_dim=layer_dim[-1])
    jax.block_until_ready(out)
    assert out.shape == (batch, layer_dim[-1])

    # Reference 1: same numerics (bf16 operands, f32 accumulation) in plain JAX.
    ref_bf16 = x
    for w, b in params:
        ref_bf16 = (
            jnp.dot(
                ref_bf16.astype(jnp.bfloat16),
                w.astype(jnp.bfloat16),
                preferred_element_type=jnp.float32,
            )
            + b
        )
    assert jnp.allclose(out, ref_bf16, atol=1e-3, rtol=1e-3)

    # Reference 2: full f32 math — looser tolerance accounts for bf16 operand rounding.
    ref_f32 = x
    for w, b in params:
        ref_f32 = ref_f32 @ w + b
    assert jnp.allclose(out, ref_f32, atol=5e-2, rtol=5e-2)

    print("KERNEL_OK")
</pallas_src>

<mosaic_0001>
module attributes {stable_mosaic.version = 11 : i64} {
  func.func @_mlp_kernel(%arg0: i32, %arg1: memref<16x128xf32, #tpu.memory_space<vmem>>, %arg2: memref<128x128xbf16, #tpu.memory_space<vmem>>, %arg3: memref<1x128xf32, #tpu.memory_space<vmem>>, %arg4: memref<128x128xbf16, #tpu.memory_space<vmem>>, %arg5: memref<1x128xf32, #tpu.memory_space<vmem>>, %arg6: memref<16x128xf32, #tpu.memory_space<vmem>>) attributes {dimension_semantics = [#tpu.dimension_semantics<parallel>], iteration_bounds = array<i64: 1>, scalar_prefetch = 0 : i64, scratch_operands = 0 : i64, tpu.core_type = #tpu.core_type<tc>, window_params = [{transform_indices = @transform_0, window_bounds = array<i64: 16, 128>}, {pipeline_mode = #tpu.pipeline_mode<synchronous>, transform_indices = @transform_1, window_bounds = array<i64: 128, 128>}, {pipeline_mode = #tpu.pipeline_mode<synchronous>, transform_indices = @transform_2, window_bounds = array<i64: 1, 128>}, {pipeline_mode = #tpu.pipeline_mode<synchronous>, transform_indices = @transform_3, window_bounds = array<i64: 128, 128>}, {pipeline_mode = #tpu.pipeline_mode<synchronous>, transform_indices = @transform_4, window_bounds = array<i64: 1, 128>}, {transform_indices = @transform_5, window_bounds = array<i64: 16, 128>}]} {
    %c0 = arith.constant 0 : index
    %c0_0 = arith.constant 0 : index
    %0 = vector.load %arg1[%c0, %c0_0] : memref<16x128xf32, #tpu.memory_space<vmem>>, vector<16x128xf32>
    %1 = arith.truncf %0 : vector<16x128xf32> to vector<16x128xbf16>
    %c0_1 = arith.constant 0 : index
    %c0_2 = arith.constant 0 : index
    %2 = vector.load %arg2[%c0_1, %c0_2] : memref<128x128xbf16, #tpu.memory_space<vmem>>, vector<128x128xbf16>
    %cst = arith.constant dense<0.000000e+00> : vector<16x128xf32>
    %3 = tpu.matmul %1, %2, %cst {dimension_numbers = #tpu.dot_dimension_numbers<[1], [0], [0], [1], [0, 0, 1, 1], [], []>} : vector<16x128xbf16>, vector<128x128xbf16>, vector<16x128xf32> -> vector<16x128xf32>
    %c0_3 = arith.constant 0 : index
    %c0_4 = arith.constant 0 : index
    %4 = vector.load %arg3[%c0_3, %c0_4] : memref<1x128xf32, #tpu.memory_space<vmem>>, vector<1x128xf32>
    %5 = vector.broadcast %4 : vector<1x128xf32> to vector<16x128xf32>
    %6 = arith.addf %3, %5 : vector<16x128xf32>
    %7 = arith.truncf %6 : vector<16x128xf32> to vector<16x128xbf16>
    %c0_5 = arith.constant 0 : index
    %c0_6 = arith.constant 0 : index
    %8 = vector.load %arg4[%c0_5, %c0_6] : memref<128x128xbf16, #tpu.memory_space<vmem>>, vector<128x128xbf16>
    %cst_7 = arith.constant dense<0.000000e+00> : vector<16x128xf32>
    %9 = tpu.matmul %7, %8, %cst_7 {dimension_numbers = #tpu.dot_dimension_numbers<[1], [0], [0], [1], [0, 0, 1, 1], [], []>} : vector<16x128xbf16>, vector<128x128xbf16>, vector<16x128xf32> -> vector<16x128xf32>
    %c0_8 = arith.constant 0 : index
    %c0_9 = arith.constant 0 : index
    %10 = vector.load %arg5[%c0_8, %c0_9] : memref<1x128xf32, #tpu.memory_space<vmem>>, vector<1x128xf32>
    %11 = vector.broadcast %10 : vector<1x128xf32> to vector<16x128xf32>
    %12 = arith.addf %9, %11 : vector<16x128xf32>
    %c0_10 = arith.constant 0 : index
    %c0_11 = arith.constant 0 : index
    %13 = vector.load %arg6[%c0_10, %c0_11] : memref<16x128xf32, #tpu.memory_space<vmem>>, vector<16x128xf32>
    tpu.vector_store %arg6[%c0_10, %c0_11], %12 {strides = array<i32>} : memref<16x128xf32, #tpu.memory_space<vmem>>, vector<16x128xf32>,
    return
  }
  func.func @transform_0(%arg0: i32) -> (i32, i32) {
    %c0_i32 = arith.constant 0 : i32
    %c0_i32_0 = arith.constant 0 : i32
    return %arg0, %c0_i32 : i32, i32
  }
  func.func @transform_1(%arg0: i32) -> (i32, i32) {
    %c0_i32 = arith.constant 0 : i32
    %c0_i32_0 = arith.constant 0 : i32
    %c0_i32_1 = arith.constant 0 : i32
    return %c0_i32, %c0_i32_0 : i32, i32
  }
  func.func @transform_2(%arg0: i32) -> (i32, i32) {
    %c0_i32 = arith.constant 0 : i32
    %c0_i32_0 = arith.constant 0 : i32
    %c0_i32_1 = arith.constant 0 : i32
    return %c0_i32, %c0_i32_0 : i32, i32
  }
  func.func @transform_3(%arg0: i32) -> (i32, i32) {
    %c0_i32 = arith.constant 0 : i32
    %c0_i32_0 = arith.constant 0 : i32
    %c0_i32_1 = arith.constant 0 : i32
    return %c0_i32, %c0_i32_0 : i32, i32
  }
  func.func @transform_4(%arg0: i32) -> (i32, i32) {
    %c0_i32 = arith.constant 0 : i32
    %c0_i32_0 = arith.constant 0 : i32
    %c0_i32_1 = arith.constant 0 : i32
    return %c0_i32, %c0_i32_0 : i32, i32
  }
  func.func @transform_5(%arg0: i32) -> (i32, i32) {
    %c0_i32 = arith.constant 0 : i32
    %c0_i32_0 = arith.constant 0 : i32
    return %arg0, %c0_i32 : i32, i32
  }
}

</mosaic_0001>

<llo_original>
// kernel: linear_mlp_forward.1
$region0: #{linear_mlp_forward.1}
  #allocation0 [shape = 'u32[]', space=smem, size = 0x4, offset = 0x4, fixed_abs, tag = 'smem constant byte address 0x4 - core index']
  #allocation1 [shape = 'u32[144,128]{1,0:T(1,128)}', space=vmem, size = 0x12000, scoped, tag = 'internal scratch']
  %s0 = inlined_call_operand.vmem [shape: f32[16,128], index: 0, kind: input, shape index: {}]
  %s1 = inlined_call_operand.hbm [shape: bf16[128,128], index: 1, kind: input, shape index: {}]
  %s2 = inlined_call_operand.vmem [shape: f32[1,128], index: 2, kind: input, shape index: {}]
  %s3 = inlined_call_operand.hbm [shape: bf16[128,128], index: 3, kind: input, shape index: {}]
  %s4 = inlined_call_operand.vmem [shape: f32[1,128], index: 4, kind: input, shape index: {}]
  %s5 = inlined_call_operand.vmem [shape: f32[16,128], index: 5, kind: output, shape index: {}]
  %s6 = sld [smem:[#allocation0]]
  $region38: #{linear_mlp_forward.1} parent=0
    _
  %s8 = ssub.s32 1, %s6
  %s9 = scalar_select 0, %s8, %s6
  $region1: #{linear_mlp_forward.1} parent=0
    #allocation2 [shape = 'u8[32768]{0}', space=vmem, size = 0x8000, scoped, tag = 'input window, operand 1, single buffered']
    #allocation3 [shape = 's32[1]{0}', space=sflag, size = 0x4, scoped, tag = 'scoped memory for linear_mlp_forward.1']
    #allocation4 [shape = 'u8[32768]{0}', space=vmem, size = 0x8000, scoped, tag = 'input window, operand 3, single buffered']
    #allocation5 [shape = 's32[1]{0}', space=sflag, size = 0x4, scoped, tag = 'scoped memory for linear_mlp_forward.1']
    %10 = vsyncpa [#allocation3], 0
    %11 = vsyncpa [#allocation5], 0
    // Predicated region
    $region2: #{linear_mlp_forward.1} parent=1 // pred_check
      _
    $region3: #{linear_mlp_forward.1} parent=1 // pred_check_branch
      %13 = sbr.rel (0) target = $region5
    $region4: #{linear_mlp_forward.1} parent=1 // pred_region
      _
    $region5: #{linear_mlp_forward.1} parent=1 // pred_fallthru
      _
    // Predicated region
    $region6: #{linear_mlp_forward.1} parent=1 // pred_check
      _
    $region7: #{linear_mlp_forward.1} parent=1 // pred_check_branch
      %15 = sbr.rel (0) target = $region9
    $region8: #{linear_mlp_forward.1} parent=1 // pred_region
      %s17 = ssub.s32 1024, 1024
      %18 = vsyncadd [#allocation3], %s17
      %s19 = sshll.u32 [#allocation2], 4
      %s20 = int_to_ptr.vmem [resolvable:$true] %s19
      %25 = dma.hbm_to_vmem [thread:$0]  %s1, 1024, %s20, [#allocation3], 64, 64, 4
    $region9: #{linear_mlp_forward.1} parent=1 // pred_fallthru
      _
    // Predicated region
    $region10: #{linear_mlp_forward.1} parent=1 // pred_check
      _
    $region11: #{linear_mlp_forward.1} parent=1 // pred_check_branch
      %27 = sbr.rel (0) target = $region13
    $region12: #{linear_mlp_forward.1} parent=1 // pred_region
      _
    $region13: #{linear_mlp_forward.1} parent=1 // pred_fallthru
      _
    // Predicated region
    $region14: #{linear_mlp_forward.1} parent=1 // pred_check
      _
    $region15: #{linear_mlp_forward.1} parent=1 // pred_check_branch
      %29 = sbr.rel (0) target = $region17
    $region16: #{linear_mlp_forward.1} parent=1 // pred_region
      %s31 = ssub.s32 1024, 1024
      %32 = vsyncadd [#allocation5], %s31
      %s33 = sshll.u32 [#allocation4], 4
      %s34 = int_to_ptr.vmem [resolvable:$true] %s33
      %39 = dma.hbm_to_vmem [thread:$0]  %s3, 1024, %s34, [#allocation5], 64, 64, 4
    $region17: #{linear_mlp_forward.1} parent=1 // pred_fallthru
      _
    // Predicated region
    $region18: #{linear_mlp_forward.1} parent=1 // pred_check
      _
    $region19: #{linear_mlp_forward.1} parent=1 // pred_check_branch
      %41 = sbr.rel (0) target = $region21
    $region20: #{linear_mlp_forward.1} parent=1 // pred_region
      _
    $region21: #{linear_mlp_forward.1} parent=1 // pred_fallthru
      _
    // Predicated region
    $region22: #{linear_mlp_forward.1} parent=1 // pred_check
      _
    $region23: #{linear_mlp_forward.1} parent=1 // pred_check_branch
      %43 = sbr.rel (0) target = $region25
    $region24: #{linear_mlp_forward.1} parent=1 // pred_region
      %44 = dma.done [#allocation3], 1024
    $region25: #{linear_mlp_forward.1} parent=1 // pred_fallthru
      _
    // Predicated region
    $region26: #{linear_mlp_forward.1} parent=1 // pred_check
      _
    $region27: #{linear_mlp_forward.1} parent=1 // pred_check_branch
      %46 = sbr.rel (0) target = $region29
    $region28: #{linear_mlp_forward.1} parent=1 // pred_region
      %47 = dma.done [#allocation5], 1024
    $region29: #{linear_mlp_forward.1} parent=1 // pred_fallthru
      _
    %v49 = vld [vmem:[%s0] sm:$0xff]
    %v50 = vld [vmem:[%s0 + $0x8] sm:$0xff]
    %v51 = vpack.c.bf16 %v50, %v49
    %v52 = vld [vmem:[#allocation2] sm:$0xf]
    %v53 = vld [vmem:[#allocation2 + $0x4] sm:$0xf]
    %v54 = vld [vmem:[#allocation2 + $0x8] sm:$0xf]
    %v55 = vld [vmem:[#allocation2 + $0xc] sm:$0xf]
    %v56 = vld [vmem:[#allocation2 + $0x10] sm:$0xf]
    %v57 = vld [vmem:[#allocation2 + $0x14] sm:$0xf]
    %v58 = vld [vmem:[#allocation2 + $0x18] sm:$0xf]
    %v59 = vld [vmem:[#allocation2 + $0x1c] sm:$0xf]
    %v60 = vld [vmem:[#allocation2 + $0x20] sm:$0xf]
    %v61 = vld [vmem:[#allocation2 + $0x24] sm:$0xf]
    %v62 = vld [vmem:[#allocation2 + $0x28] sm:$0xf]
    %v63 = vld [vmem:[#allocation2 + $0x2c] sm:$0xf]
    %v64 = vld [vmem:[#allocation2 + $0x30] sm:$0xf]
    %v65 = vld [vmem:[#allocation2 + $0x34] sm:$0xf]
    %v66 = vld [vmem:[#allocation2 + $0x38] sm:$0xf]
    %v67 = vld [vmem:[#allocation2 + $0x3c] sm:$0xf]
    %v68 = vld [vmem:[%s2] sm:$0x1]
    %v70 = vlaneseq
    %v71 = vshrl.u32 %v70, 7
    %v72 = vsub.s32 0, %v71
    %v73 = vrot.slane %v68, %v72
    %v91 = vunpack.c.l.b16 %v52
    %v92 = vunpack.c.l.b16 %v53
    %v93 = vunpack.c.l.b16 %v54
    %v94 = vunpack.c.l.b16 %v55
    %v95 = vunpack.c.l.b16 %v56
    %v96 = vunpack.c.l.b16 %v57
    %v97 = vunpack.c.l.b16 %v58
    %v98 = vunpack.c.l.b16 %v59
    %v99 = vunpack.c.l.b16 %v60
    %v100 = vunpack.c.l.b16 %v61
    %v101 = vunpack.c.l.b16 %v62
    %v102 = vunpack.c.l.b16 %v63
    %v103 = vunpack.c.l.b16 %v64
    %v104 = vunpack.c.l.b16 %v65
    %v105 = vunpack.c.l.b16 %v66
    %v106 = vunpack.c.l.b16 %v67
    %v107 = vpack.c.b16 %v92, %v91
    %v108 = vpack.c.b16 %v94, %v93
    %v109 = vpack.c.b16 %v96, %v95
    %v110 = vpack.c.b16 %v98, %v97
    %v111 = vpack.c.b16 %v100, %v99
    %v112 = vpack.c.b16 %v102, %v101
    %v113 = vpack.c.b16 %v104, %v103
    %v114 = vpack.c.b16 %v106, %v105
    %123 = vmatprep.subr.bf16.mxu0 0
    %124 = vmatpush1.bf16.msra.mxu0 %v107
    %125 = vmatprep.subr.bf16.mxu0 0
    %126 = vmatpush1.bf16.msra.mxu0 %v108
    %127 = vmatprep.subr.bf16.mxu0 0
    %128 = vmatpush1.bf16.msra.mxu0 %v109
    %129 = vmatprep.subr.bf16.mxu0 0
    %130 = vmatpush1.bf16.msra.mxu0 %v110
    %131 = vmatprep.subr.bf16.mxu0 0
    %132 = vmatpush1.bf16.msra.mxu0 %v111
    %133 = vmatprep.subr.bf16.mxu0 0
    %134 = vmatpush1.bf16.msra.mxu0 %v112
    %135 = vmatprep.subr.bf16.mxu0 0
    %136 = vmatpush1.bf16.msra.mxu0 %v113
    %137 = vmatprep.subr.bf16.mxu0 0
    %138 = vmatpush1.bf16.msra.mxu0 %v114
    %139 = vmatprep.subr.bf16.mxu0 0
    %140 = vmatpush1.bf16.msra.mxu0 0
    %141 = vmatprep.subr.bf16.mxu0 0
    %142 = vmatpush1.bf16.msra.mxu0 0
    %143 = vmatprep.subr.bf16.mxu0 0
    %144 = vmatpush1.bf16.msra.mxu0 0
    %145 = vmatprep.subr.bf16.mxu0 0
    %146 = vmatpush1.bf16.msra.mxu0 0
    %147 = vmatprep.subr.bf16.mxu0 0
    %148 = vmatpush1.bf16.msra.mxu0 0
    %149 = vmatprep.subr.bf16.mxu0 0
    %150 = vmatpush1.bf16.msra.mxu0 0
    %151 = vmatprep.subr.bf16.mxu0 0
    %152 = vmatpush1.bf16.msra.mxu0 0
    %153 = vmatprep.subr.bf16.mxu0 0
    %154 = vmatpush1.bf16.msra.mxu0 0
    %155 = vmatprep.mubr.bf16.mxu0 0
    %156 = vmatmul.mubr.bf16.gmra.mrb[0].mxu0 %v51
    %v157 = vpop.f32.mrb[0].mxu0
    %v158 = vadd.f32 %v73, %v157
    %v159 = vpop.f32.mrb[0].mxu0
    %v160 = vpop.f32.mrb[0].mxu0
    %v161 = vadd.f32 %v73, %v160
    %v162 = vpop.f32.mrb[0].mxu0
    %163 = vdwg.mxu0
    %v164 = vpack.c.bf16 %v161, %v158
    %v165 = vld [vmem:[#allocation4] sm:$0xf]
    %v166 = vld [vmem:[#allocation4 + $0x4] sm:$0xf]
    %v167 = vld [vmem:[#allocation4 + $0x8] sm:$0xf]
    %v168 = vld [vmem:[#allocation4 + $0xc] sm:$0xf]
    %v169 = vld [vmem:[#allocation4 + $0x10] sm:$0xf]
    %v170 = vld [vmem:[#allocation4 + $0x14] sm:$0xf]
    %v171 = vld [vmem:[#allocation4 + $0x18] sm:$0xf]
    %v172 = vld [vmem:[#allocation4 + $0x1c] sm:$0xf]
    %v173 = vld [vmem:[#allocation4 + $0x20] sm:$0xf]
    %v174 = vld [vmem:[#allocation4 + $0x24] sm:$0xf]
    %v175 = vld [vmem:[#allocation4 + $0x28] sm:$0xf]
    %v176 = vld [vmem:[#allocation4 + $0x2c] sm:$0xf]
    %v177 = vld [vmem:[#allocation4 + $0x30] sm:$0xf]
    %v178 = vld [vmem:[#allocation4 + $0x34] sm:$0xf]
    %v179 = vld [vmem:[#allocation4 + $0x38] sm:$0xf]
    %v180 = vld [vmem:[#allocation4 + $0x3c] sm:$0xf]
    %v181 = vld [vmem:[%s4] sm:$0x1]
    %v183 = vlaneseq
    %v184 = vshrl.u32 %v183, 7
    %v185 = vsub.s32 0, %v184
    %v186 = vrot.slane %v181, %v185
    %v204 = vunpack.c.l.b16 %v165
    %v205 = vunpack.c.l.b16 %v166
    %v206 = vunpack.c.l.b16 %v167
    %v207 = vunpack.c.l.b16 %v168
    %v208 = vunpack.c.l.b16 %v169
    %v209 = vunpack.c.l.b16 %v170
    %v210 = vunpack.c.l.b16 %v171
    %v211 = vunpack.c.l.b16 %v172
    %v212 = vunpack.c.l.b16 %v173
    %v213 = vunpack.c.l.b16 %v174
    %v214 = vunpack.c.l.b16 %v175
    %v215 = vunpack.c.l.b16 %v176
    %v216 = vunpack.c.l.b16 %v177
    %v217 = vunpack.c.l.b16 %v178
    %v218 = vunpack.c.l.b16 %v179
    %v219 = vunpack.c.l.b16 %v180
    %v220 = vpack.c.b16 %v205, %v204
    %v221 = vpack.c.b16 %v207, %v206
    %v222 = vpack.c.b16 %v209, %v208
    %v223 = vpack.c.b16 %v211, %v210
    %v224 = vpack.c.b16 %v213, %v212
    %v225 = vpack.c.b16 %v215, %v214
    %v226 = vpack.c.b16 %v217, %v216
    %v227 = vpack.c.b16 %v219, %v218
    %236 = vmatprep.subr.bf16.mxu0 0
    %237 = vmatpush1.bf16.msra.mxu0 %v220
    %238 = vmatprep.subr.bf16.mxu0 0
    %239 = vmatpush1.bf16.msra.mxu0 %v221
    %240 = vmatprep.subr.bf16.mxu0 0
    %241 = vmatpush1.bf16.msra.mxu0 %v222
    %242 = vmatprep.subr.bf16.mxu0 0
    %243 = vmatpush1.bf16.msra.mxu0 %v223
    %244 = vmatprep.subr.bf16.mxu0 0
    %245 = vmatpush1.bf16.msra.mxu0 %v224
    %246 = vmatprep.subr.bf16.mxu0 0
    %247 = vmatpush1.bf16.msra.mxu0 %v225
    %248 = vmatprep.subr.bf16.mxu0 0
    %249 = vmatpush1.bf16.msra.mxu0 %v226
    %250 = vmatprep.subr.bf16.mxu0 0
    %251 = vmatpush1.bf16.msra.mxu0 %v227
    %252 = vmatprep.subr.bf16.mxu0 0
    %253 = vmatpush1.bf16.msra.mxu0 0
    %254 = vmatprep.subr.bf16.mxu0 0
    %255 = vmatpush1.bf16.msra.mxu0 0
    %256 = vmatprep.subr.bf16.mxu0 0
    %257 = vmatpush1.bf16.msra.mxu0 0
    %258 = vmatprep.subr.bf16.mxu0 0
    %259 = vmatpush1.bf16.msra.mxu0 0
    %260 = vmatprep.subr.bf16.mxu0 0
    %261 = vmatpush1.bf16.msra.mxu0 0
    %262 = vmatprep.subr.bf16.mxu0 0
    %263 = vmatpush1.bf16.msra.mxu0 0
    %264 = vmatprep.subr.bf16.mxu0 0
    %265 = vmatpush1.bf16.msra.mxu0 0
    %266 = vmatprep.subr.bf16.mxu0 0
    %267 = vmatpush1.bf16.msra.mxu0 0
    %268 = vmatprep.mubr.bf16.mxu0 0
    %269 = vmatmul.mubr.bf16.gmra.mrb[0].mxu0 %v164
    %v270 = vpop.f32.mrb[0].mxu0
    %v271 = vadd.f32 %v186, %v270
    %v272 = vpop.f32.mrb[0].mxu0
    %v273 = vpop.f32.mrb[0].mxu0
    %v274 = vadd.f32 %v186, %v273
    %v275 = vpop.f32.mrb[0].mxu0
    %276 = vdwg.mxu0
    %277 = vst [vmem:[%s5] sm:$0xff] %v271
    %278 = vst [vmem:[%s5 + $0x8] sm:$0xff] %v274
    // Predicated region
    $region30: #{linear_mlp_forward.1} parent=1 // pred_check
      _
    $region31: #{linear_mlp_forward.1} parent=1 // pred_check_branch
      %280 = sbr.rel (0) target = $region33
    $region32: #{linear_mlp_forward.1} parent=1 // pred_region
      _
    $region33: #{linear_mlp_forward.1} parent=1 // pred_fallthru
      _
    // Predicated region
    $region34: #{linear_mlp_forward.1} parent=1 // pred_check
      _
    $region35: #{linear_mlp_forward.1} parent=1 // pred_check_branch
      %282 = sbr.rel (0) target = $region37
    $region36: #{linear_mlp_forward.1} parent=1 // pred_region
      _
    $region37: #{linear_mlp_forward.1} parent=1 // pred_fallthru
      _
    %283 = vsyncpa [#allocation3], 1
    %284 = vsyncpa [#allocation5], 1

</llo_original>
